<compile_context>
chip_gen: v6e
topology: v6e:2x2x1
jax: 0.10.0
libtpu: 0.0.40
codegen_flags: <defaults>
</compile_context>

<pallas_src>
import functools

import jax
import jax.numpy as jnp
from jax import lax
from jax.experimental import pallas as pl
from jax.experimental.pallas import tpu as pltpu

_MIB = 1024 * 1024


def _pick_tile(n, candidates):
    for c in candidates:
        if c <= n and n % c == 0:
            return c
    # TODO(synk): pad/mask for dims no candidate divides; the full-dim fallback
    # stays correct but may be layout/VMEM hostile for odd shapes.
    return n


def _vmem_capacity_bytes():
    try:
        return int(pltpu.get_tpu_info().vmem_capacity_bytes)
    except Exception:
        return 64 * _MIB  # conservative (v7x per-core) fallback


def _corr_footprint(tm, tk, in_bytes):
    acc = 2 * tm * tm * 4                    # ping-pong f32 accumulator
    ins = 2 * (2 * tk * tm * in_bytes)       # double-buffered z1/z2 tiles
    stats = 2 * (tm * 512) + 2 * (tm * 32)   # lane/sublane padded (tm,2)/(2,tn)
    return acc + ins + stats


def _pick_corr_tiles(bs, d, in_bytes, budget):
    """Largest feature tile (and then largest batch tile) that fits the budget."""
    tm_cands = [c for c in (2048, 1536, 1024, 768, 512, 384, 256, 128)
                if c <= d and d % c == 0] or [d]
    tk_cands = [c for c in (512, 256, 128, 64, 32, 16, 8)
                if c <= bs and bs % c == 0] or [bs]
    for tm in tm_cands:
        for tk in tk_cands:
            if _corr_footprint(tm, tk, in_bytes) <= budget:
                return tm, tk
    return tm_cands[-1], tk_cands[-1]


# ---------------------------------------------------------------------------
# Stage 1: fused per-feature BatchNorm statistics for both views.
# Outputs are packed per side as (2, d): row 0 = 1/std, row 1 = mean/std.
# ---------------------------------------------------------------------------
def _stats_kernel(z1_ref, z2_ref, st1_ref, st2_ref,
                  s1_ref, q1_ref, s2_ref, q2_ref, *, inv_bs, eps):
    k = pl.program_id(1)

    @pl.when(k == 0)
    def _():
        for r in (s1_ref, q1_ref, s2_ref, q2_ref):
            r[...] = jnp.zeros_like(r)

    z1 = z1_ref[...].astype(jnp.float32)                  # (tk, tn)
    z2 = z2_ref[...].astype(jnp.float32)
    s1_ref[...] += jnp.sum(z1, axis=0, keepdims=True)     # (1, tn)
    q1_ref[...] += jnp.sum(z1 * z1, axis=0, keepdims=True)
    s2_ref[...] += jnp.sum(z2, axis=0, keepdims=True)
    q2_ref[...] += jnp.sum(z2 * z2, axis=0, keepdims=True)

    @pl.when(k == pl.num_programs(1) - 1)
    def _():
        def finalize(s_ref, q_ref, st_ref):
            m = s_ref[...] * inv_bs
            v = jnp.maximum(q_ref[...] * inv_bs - m * m, 0.0)  # clamp cancellation
            istd = lax.rsqrt(v + eps)                          # EUP rsqrt, no divide
            st_ref[0:1, :] = istd
            st_ref[1:2, :] = m * istd
        finalize(s1_ref, q1_ref, st1_ref)
        finalize(s2_ref, q2_ref, st2_ref)


def _batch_stats(z1, z2, *, tn, tk, eps, vmem_limit):
    bs, d = z1.shape
    kernel = functools.partial(_stats_kernel, inv_bs=1.0 / bs, eps=float(eps))
    out = jax.ShapeDtypeStruct((2, d), jnp.float32)
    return pl.pallas_call(
        kernel,
        grid=(d // tn, bs // tk),
        in_specs=[pl.BlockSpec((tk, tn), lambda j, k: (k, j)),
                  pl.BlockSpec((tk, tn), lambda j, k: (k, j))],
        out_specs=(pl.BlockSpec((2, tn), lambda j, k: (0, j)),
                   pl.BlockSpec((2, tn), lambda j, k: (0, j))),
        out_shape=(out, out),
        scratch_shapes=[pltpu.VMEM((1, tn), jnp.float32) for _ in range(4)],
        compiler_params=pltpu.CompilerParams(
            dimension_semantics=("parallel", "arbitrary"),
            vmem_limit_bytes=vmem_limit),
    )(z1, z2)


# ---------------------------------------------------------------------------
# Stage 2: tiled cross-correlation + per-tile on/off-diagonal reductions.
# ---------------------------------------------------------------------------
def _corr_kernel(z1_ref, z2_ref, st1_ref, st2_ref, part_ref, acc_ref, *, inv_bs):
    i = pl.program_id(0)
    j = pl.program_id(1)
    k = pl.program_id(2)
    # Ping-pong accumulator slot: consecutive (i, j) tiles alternate slots so
    # this tile's epilogue does not serialize against the next tile's k==0
    # zero-init / first MXU push.
    slot = (i * pl.num_programs(1) + j) % 2

    @pl.when(k == 0)
    def _():
        acc_ref[slot] = jnp.zeros(acc_ref.shape[1:], acc_ref.dtype)

    # Raw tiles straight into the MXU, contracting the batch axis of both
    # operands (z1ᵀ·z2), f32 accumulation.
    acc_ref[slot] += lax.dot_general(
        z1_ref[...], z2_ref[...],
        dimension_numbers=(((0,), (0,)), ((), ())),
        preferred_element_type=jnp.float32)

    @pl.when(k == pl.num_programs(2) - 1)
    def _():
        s1 = st1_ref[:, 0:1]      # (tm, 1)  1/std(z1)
        a1 = st1_ref[:, 1:2]      # (tm, 1)  mean(z1)/std(z1)
        s2 = st2_ref[0:1, :]      # (1, tn)  1/std(z2)
        a2 = st2_ref[1:2, :]      # (1, tn)  mean(z2)/std(z2)
        # BN folded in:  c = s1 ⊙ (z1ᵀz2/bs − m1 m2ᵀ) ⊙ s2
        c = acc_ref[slot] * (inv_bs * (s1 * s2)) - a1 * a2
        total_sq = jnp.sum(c * c)

        @pl.when(i == j)
        def _():
            # Only square block-diagonal tiles contain diagonal entries.
            row = lax.broadcasted_iota(jnp.int32, c.shape, 0)
            col = lax.broadcasted_iota(jnp.int32, c.shape, 1)
            is_diag = row == col
            diag_sq = jnp.sum(jnp.where(is_diag, c * c, 0.0))
            on = jnp.sum(jnp.where(is_diag, (c - 1.0) ** 2, 0.0))
            part_ref[0, 0, 0, 0] = on
            part_ref[0, 0, 0, 1] = total_sq - diag_sq

        @pl.when(i != j)
        def _():
            part_ref[0, 0, 0, 0] = jnp.float32(0.0)
            part_ref[0, 0, 0, 1] = total_sq


def barlow_loss(z1, z2, *, lmbda, scale_loss=0.048, eps=1e-5,
                distributed=False, mxu_dtype=jnp.bfloat16, tm=None, tk=None):
    """Pallas implementation of Barlow_Loss.forward: (z1, z2) -> (loss, dict)."""
    if distributed:
        # TODO(synk): distributed=True branch (torch.distributed all_reduce of c
        # and world_size-scaled bs) is not implemented; fail loudly instead of
        # silently computing the single-host loss.
        raise NotImplementedError("barlow_loss: distributed=True is not supported")
    assert z1.shape == z2.shape and z1.ndim == 2, (z1.shape, z2.shape)
    bs, d = z1.shape
    cap = _vmem_capacity_bytes()

    # ---- Stage 1: fused BN stats (f32, from the original inputs) -----------
    tn_s = _pick_tile(d, (1024, 512, 256, 128))
    tk_s = _pick_tile(bs, (256, 128, 64, 32, 16, 8))
    stats_need = 2 * 2 * tk_s * tn_s * z1.dtype.itemsize
    stats_vmem = int(min(cap // 2, max(stats_need + 16 * _MIB, 32 * _MIB)))
    st1, st2 = _batch_stats(z1, z2, tn=tn_s, tk=tk_s, eps=eps, vmem_limit=stats_vmem)

    # ---- Stage 2: cross-correlation + diagonal partial sums ----------------
    # Feed the MXU bf16 operands (halves the dominant HBM stream, native MXU
    # rate); accumulation stays f32 and the BN stats come from the raw inputs.
    if mxu_dtype is not None and z1.dtype != jnp.dtype(mxu_dtype):
        zc1, zc2 = z1.astype(mxu_dtype), z2.astype(mxu_dtype)
    else:
        zc1, zc2 = z1, z2
    in_bytes = jnp.dtype(zc1.dtype).itemsize

    budget = cap // 2                          # generation-aware tile budget
    auto_tm, auto_tk = _pick_corr_tiles(bs, d, in_bytes, budget)
    tm = auto_tm if tm is None else tm
    tk = auto_tk if tk is None else tk
    tn = tm       # square feature tiles -> diagonal entries only when i == j
    assert d % tm == 0 and bs % tk == 0, (d, tm, bs, tk)

    need = _corr_footprint(tm, tk, in_bytes)
    corr_vmem = int(min(cap - 8 * _MIB, max(need + 24 * _MIB, 32 * _MIB)))

    ni, nj, nk = d // tm, d // tn, bs // tk
    kernel = functools.partial(_corr_kernel, inv_bs=1.0 / bs)
    partials = pl.pallas_call(
        kernel,
        grid=(ni, nj, nk),
        in_specs=[
            pl.BlockSpec((tk, tm), lambda i, j, k: (k, i)),   # z1 tile (batch, feat_i)
            pl.BlockSpec((tk, tn), lambda i, j, k: (k, j)),   # z2 tile (batch, feat_j)
            pl.BlockSpec((tm, 2), lambda i, j, k: (i, 0)),    # packed stats(z1), column side
            pl.BlockSpec((2, tn), lambda i, j, k: (0, j)),    # packed stats(z2), row side
        ],
        out_specs=pl.BlockSpec((1, 1, 1, 2), lambda i, j, k: (i, j, 0, 0)),
        out_shape=jax.ShapeDtypeStruct((ni, nj, 1, 2), jnp.float32),
        scratch_shapes=[pltpu.VMEM((2, tm, tn), jnp.float32)],   # ping-pong acc
        compiler_params=pltpu.CompilerParams(
            dimension_semantics=("parallel", "parallel", "arbitrary"),
            vmem_limit_bytes=corr_vmem),
    )(zc1, zc2, st1.T, st2)

    on_diag = jnp.sum(partials[..., 0])
    off_diag = jnp.sum(partials[..., 1])
    loss = (on_diag + lmbda * off_diag) * scale_loss
    return loss, {"loss": loss, "on_diag": on_diag, "off_diag": off_diag}


# ---------------------------------------------------------------------------
# Pure-JAX reference mirroring the PyTorch module (distributed=False).
# ---------------------------------------------------------------------------
def _reference(z1, z2, *, lmbda, scale_loss=0.048, eps=1e-5):
    z1 = z1.astype(jnp.float32)
    z2 = z2.astype(jnp.float32)
    bs = z1.shape[0]

    def bn(z):
        m = jnp.mean(z, axis=0, keepdims=True)
        v = jnp.mean((z - m) ** 2, axis=0, keepdims=True)
        return (z - m) / jnp.sqrt(v + eps)

    c = jnp.matmul(bn(z1).T, bn(z2), precision=lax.Precision.HIGHEST) / bs
    diag = jnp.diagonal(c)
    on = jnp.sum((diag - 1.0) ** 2)
    off = jnp.sum(c * c) - jnp.sum(diag ** 2)
    return (on + lmbda * off) * scale_loss, on, off


if __name__ == "__main__":
    key = jax.random.PRNGKey(0)
    k1, k2 = jax.random.split(key)
    bs, out_dim = 16, 256
    lmbda = 0.0051

    z1 = jax.random.normal(k1, (bs, out_dim), dtype=jnp.float32)
    z2 = z1 + 0.1 * jax.random.normal(k2, (bs, out_dim), dtype=jnp.float32)
    # Round the test inputs to bf16-representable values so the bf16-MXU kernel
    # path, the f32-MXU kernel path and the f32 XLA reference all see identical
    # operands; tolerances then only cover accumulation-order / rsqrt noise.
    z1 = z1.astype(jnp.bfloat16).astype(jnp.float32)
    z2 = z2.astype(jnp.bfloat16).astype(jnp.float32)

    ref_loss, ref_on, ref_off = _reference(z1, z2, lmbda=lmbda, scale_loss=0.048)

    # Run A: f32 MXU operands, forced multi-tile grid (2x2 feature tiles, 2
    # batch steps) -> exercises k-accumulation, ping-pong slots, both diag paths.
    loss_a, dict_a = barlow_loss(z1, z2, lmbda=lmbda, scale_loss=0.048,
                                 mxu_dtype=jnp.float32, tm=128, tk=8)
    # Run B: defaults (auto-sized tiles, bf16 MXU operands).
    loss_b, dict_b = barlow_loss(z1, z2, lmbda=lmbda, scale_loss=0.048)
    jax.block_until_ready((loss_a, loss_b))

    for loss, ld in ((loss_a, dict_a), (loss_b, dict_b)):
        assert jnp.allclose(loss, ref_loss, rtol=5e-3, atol=1e-5), (loss, ref_loss)
        assert jnp.allclose(ld["on_diag"], ref_on, rtol=5e-3, atol=2e-5), (
            ld["on_diag"], ref_on)
        assert jnp.allclose(ld["off_diag"], ref_off, rtol=5e-3, atol=1e-5), (
            ld["off_diag"], ref_off)

    print("KERNEL_OK")
</pallas_src>

<mosaic_0001>
module attributes {stable_mosaic.version = 11 : i64} {
  func.func @_stats_kernel(%arg0: i32, %arg1: i32, %arg2: memref<16x256xf32, #tpu.memory_space<vmem>>, %arg3: memref<16x256xf32, #tpu.memory_space<vmem>>, %arg4: memref<2x256xf32, #tpu.memory_space<vmem>>, %arg5: memref<2x256xf32, #tpu.memory_space<vmem>>, %arg6: memref<1x256xf32, #tpu.memory_space<vmem>>, %arg7: memref<1x256xf32, #tpu.memory_space<vmem>>, %arg8: memref<1x256xf32, #tpu.memory_space<vmem>>, %arg9: memref<1x256xf32, #tpu.memory_space<vmem>>) attributes {dimension_semantics = [#tpu.dimension_semantics<parallel>, #tpu.dimension_semantics<arbitrary>], iteration_bounds = array<i64: 1, 1>, scalar_prefetch = 0 : i64, scratch_operands = 4 : i64, tpu.core_type = #tpu.core_type<tc>, window_params = [{transform_indices = @transform_0, window_bounds = array<i64: 16, 256>}, {transform_indices = @transform_1, window_bounds = array<i64: 16, 256>}, {transform_indices = @transform_2, window_bounds = array<i64: 2, 256>}, {transform_indices = @transform_3, window_bounds = array<i64: 2, 256>}]} {
    %c0_i32 = arith.constant 0 : i32
    %0 = arith.cmpi eq, %arg1, %c0_i32 : i32
    %1 = arith.extui %0 : i1 to i32
    %c0_i32_0 = arith.constant 0 : i32
    %2 = arith.cmpi ne, %1, %c0_i32_0 : i32
    scf.if %2 {
      %cst_25 = arith.constant 0.000000e+00 : f32
      %30 = vector.broadcast %cst_25 : f32 to vector<1x256xf32>
      %c0_26 = arith.constant 0 : index
      %c0_27 = arith.constant 0 : index
      %31 = vector.load %arg6[%c0_26, %c0_27] : memref<1x256xf32, #tpu.memory_space<vmem>>, vector<1x256xf32>
      tpu.vector_store %arg6[%c0_26, %c0_27], %30 {strides = array<i32>} : memref<1x256xf32, #tpu.memory_space<vmem>>, vector<1x256xf32>,
      %cst_28 = arith.constant 0.000000e+00 : f32
      %32 = vector.broadcast %cst_28 : f32 to vector<1x256xf32>
      %c0_29 = arith.constant 0 : index
      %c0_30 = arith.constant 0 : index
      %33 = vector.load %arg7[%c0_29, %c0_30] : memref<1x256xf32, #tpu.memory_space<vmem>>, vector<1x256xf32>
      tpu.vector_store %arg7[%c0_29, %c0_30], %32 {strides = array<i32>} : memref<1x256xf32, #tpu.memory_space<vmem>>, vector<1x256xf32>,
      %cst_31 = arith.constant 0.000000e+00 : f32
      %34 = vector.broadcast %cst_31 : f32 to vector<1x256xf32>
      %c0_32 = arith.constant 0 : index
      %c0_33 = arith.constant 0 : index
      %35 = vector.load %arg8[%c0_32, %c0_33] : memref<1x256xf32, #tpu.memory_space<vmem>>, vector<1x256xf32>
      tpu.vector_store %arg8[%c0_32, %c0_33], %34 {strides = array<i32>} : memref<1x256xf32, #tpu.memory_space<vmem>>, vector<1x256xf32>,
      %cst_34 = arith.constant 0.000000e+00 : f32
      %36 = vector.broadcast %cst_34 : f32 to vector<1x256xf32>
      %c0_35 = arith.constant 0 : index
      %c0_36 = arith.constant 0 : index
      %37 = vector.load %arg9[%c0_35, %c0_36] : memref<1x256xf32, #tpu.memory_space<vmem>>, vector<1x256xf32>
      tpu.vector_store %arg9[%c0_35, %c0_36], %36 {strides = array<i32>} : memref<1x256xf32, #tpu.memory_space<vmem>>, vector<1x256xf32>,
    } else {
    }
    %c0 = arith.constant 0 : index
    %c0_1 = arith.constant 0 : index
    %3 = vector.load %arg2[%c0, %c0_1] : memref<16x256xf32, #tpu.memory_space<vmem>>, vector<16x256xf32>
    %c0_2 = arith.constant 0 : index
    %c0_3 = arith.constant 0 : index
    %4 = vector.load %arg3[%c0_2, %c0_3] : memref<16x256xf32, #tpu.memory_space<vmem>>, vector<16x256xf32>
    %c0_4 = arith.constant 0 : index
    %c0_5 = arith.constant 0 : index
    %5 = vector.load %arg6[%c0_4, %c0_5] : memref<1x256xf32, #tpu.memory_space<vmem>>, vector<1x256xf32>
    %cst = arith.constant dense<0.000000e+00> : vector<256xf32>
    %6 = vector.multi_reduction <add>, %3, %cst [0] : vector<16x256xf32> to vector<256xf32>
    %7 = vector.shape_cast %6 : vector<256xf32> to vector<1x256xf32>
    %8 = arith.addf %5, %7 : vector<1x256xf32>
    %c0_6 = arith.constant 0 : index
    %c0_7 = arith.constant 0 : index
    %9 = vector.load %arg6[%c0_6, %c0_7] : memref<1x256xf32, #tpu.memory_space<vmem>>, vector<1x256xf32>
    tpu.vector_store %arg6[%c0_6, %c0_7], %8 {strides = array<i32>} : memref<1x256xf32, #tpu.memory_space<vmem>>, vector<1x256xf32>,
    %c0_8 = arith.constant 0 : index
    %c0_9 = arith.constant 0 : index
    %10 = vector.load %arg7[%c0_8, %c0_9] : memref<1x256xf32, #tpu.memory_space<vmem>>, vector<1x256xf32>
    %11 = arith.mulf %3, %3 : vector<16x256xf32>
    %cst_10 = arith.constant dense<0.000000e+00> : vector<256xf32>
    %12 = vector.multi_reduction <add>, %11, %cst_10 [0] : vector<16x256xf32> to vector<256xf32>
    %13 = vector.shape_cast %12 : vector<256xf32> to vector<1x256xf32>
    %14 = arith.addf %10, %13 : vector<1x256xf32>
    %c0_11 = arith.constant 0 : index
    %c0_12 = arith.constant 0 : index
    %15 = vector.load %arg7[%c0_11, %c0_12] : memref<1x256xf32, #tpu.memory_space<vmem>>, vector<1x256xf32>
    tpu.vector_store %arg7[%c0_11, %c0_12], %14 {strides = array<i32>} : memref<1x256xf32, #tpu.memory_space<vmem>>, vector<1x256xf32>,
    %c0_13 = arith.constant 0 : index
    %c0_14 = arith.constant 0 : index
    %16 = vector.load %arg8[%c0_13, %c0_14] : memref<1x256xf32, #tpu.memory_space<vmem>>, vector<1x256xf32>
    %cst_15 = arith.constant dense<0.000000e+00> : vector<256xf32>
    %17 = vector.multi_reduction <add>, %4, %cst_15 [0] : vector<16x256xf32> to vector<256xf32>
    %18 = vector.shape_cast %17 : vector<256xf32> to vector<1x256xf32>
    %19 = arith.addf %16, %18 : vector<1x256xf32>
    %c0_16 = arith.constant 0 : index
    %c0_17 = arith.constant 0 : index
    %20 = vector.load %arg8[%c0_16, %c0_17] : memref<1x256xf32, #tpu.memory_space<vmem>>, vector<1x256xf32>
    tpu.vector_store %arg8[%c0_16, %c0_17], %19 {strides = array<i32>} : memref<1x256xf32, #tpu.memory_space<vmem>>, vector<1x256xf32>,
    %c0_18 = arith.constant 0 : index
    %c0_19 = arith.constant 0 : index
    %21 = vector.load %arg9[%c0_18, %c0_19] : memref<1x256xf32, #tpu.memory_space<vmem>>, vector<1x256xf32>
    %22 = arith.mulf %4, %4 : vector<16x256xf32>
    %cst_20 = arith.constant dense<0.000000e+00> : vector<256xf32>
    %23 = vector.multi_reduction <add>, %22, %cst_20 [0] : vector<16x256xf32> to vector<256xf32>
    %24 = vector.shape_cast %23 : vector<256xf32> to vector<1x256xf32>
    %25 = arith.addf %21, %24 : vector<1x256xf32>
    %c0_21 = arith.constant 0 : index
    %c0_22 = arith.constant 0 : index
    %26 = vector.load %arg9[%c0_21, %c0_22] : memref<1x256xf32, #tpu.memory_space<vmem>>, vector<1x256xf32>
    tpu.vector_store %arg9[%c0_21, %c0_22], %25 {strides = array<i32>} : memref<1x256xf32, #tpu.memory_space<vmem>>, vector<1x256xf32>,
    %c0_i32_23 = arith.constant 0 : i32
    %27 = arith.cmpi eq, %arg1, %c0_i32_23 : i32
    %28 = arith.extui %27 : i1 to i32
    %c0_i32_24 = arith.constant 0 : i32
    %29 = arith.cmpi ne, %28, %c0_i32_24 : i32
    scf.if %29 {
      %c0_25 = arith.constant 0 : index
      %c0_26 = arith.constant 0 : index
      %30 = vector.load %arg6[%c0_25, %c0_26] : memref<1x256xf32, #tpu.memory_space<vmem>>, vector<1x256xf32>
      %cst_27 = arith.constant 6.250000e-02 : f32
      %31 = vector.broadcast %cst_27 : f32 to vector<1x256xf32>
      %32 = arith.mulf %30, %31 : vector<1x256xf32>
      %c0_28 = arith.constant 0 : index
      %c0_29 = arith.constant 0 : index
      %33 = vector.load %arg7[%c0_28, %c0_29] : memref<1x256xf32, #tpu.memory_space<vmem>>, vector<1x256xf32>
      %cst_30 = arith.constant 6.250000e-02 : f32
      %34 = vector.broadcast %cst_30 : f32 to vector<1x256xf32>
      %35 = arith.mulf %33, %34 : vector<1x256xf32>
      %36 = arith.mulf %32, %32 : vector<1x256xf32>
      %37 = arith.subf %35, %36 : vector<1x256xf32>
      %cst_31 = arith.constant 0.000000e+00 : f32
      %38 = vector.broadcast %cst_31 : f32 to vector<1x256xf32>
      %39 = arith.maximumf %37, %38 : vector<1x256xf32>
      %cst_32 = arith.constant 9.99999974E-6 : f32
      %40 = vector.broadcast %cst_32 : f32 to vector<1x256xf32>
      %41 = arith.addf %39, %40 : vector<1x256xf32>
      %42 = math.rsqrt %41 : vector<1x256xf32>
      %c0_33 = arith.constant 0 : index
      %c0_34 = arith.constant 0 : index
      %43 = vector.load %arg4[%c0_33, %c0_34] : memref<2x256xf32, #tpu.memory_space<vmem>>, vector<1x256xf32>
      tpu.vector_store %arg4[%c0_33, %c0_34], %42 {strides = array<i32>} : memref<2x256xf32, #tpu.memory_space<vmem>>, vector<1x256xf32>,
      %44 = arith.mulf %32, %42 : vector<1x256xf32>
      %c1 = arith.constant 1 : index
      %c0_35 = arith.constant 0 : index
      %45 = vector.load %arg4[%c1, %c0_35] : memref<2x256xf32, #tpu.memory_space<vmem>>, vector<1x256xf32>
      tpu.vector_store %arg4[%c1, %c0_35], %44 {strides = array<i32>} : memref<2x256xf32, #tpu.memory_space<vmem>>, vector<1x256xf32>,
      %c0_36 = arith.constant 0 : index
      %c0_37 = arith.constant 0 : index
      %46 = vector.load %arg8[%c0_36, %c0_37] : memref<1x256xf32, #tpu.memory_space<vmem>>, vector<1x256xf32>
      %cst_38 = arith.constant 6.250000e-02 : f32
      %47 = vector.broadcast %cst_38 : f32 to vector<1x256xf32>
      %48 = arith.mulf %46, %47 : vector<1x256xf32>
      %c0_39 = arith.constant 0 : index
      %c0_40 = arith.constant 0 : index
      %49 = vector.load %arg9[%c0_39, %c0_40] : memref<1x256xf32, #tpu.memory_space<vmem>>, vector<1x256xf32>
      %cst_41 = arith.constant 6.250000e-02 : f32
      %50 = vector.broadcast %cst_41 : f32 to vector<1x256xf32>
      %51 = arith.mulf %49, %50 : vector<1x256xf32>
      %52 = arith.mulf %48, %48 : vector<1x256xf32>
      %53 = arith.subf %51, %52 : vector<1x256xf32>
      %cst_42 = arith.constant 0.000000e+00 : f32
      %54 = vector.broadcast %cst_42 : f32 to vector<1x256xf32>
      %55 = arith.maximumf %53, %54 : vector<1x256xf32>
      %cst_43 = arith.constant 9.99999974E-6 : f32
      %56 = vector.broadcast %cst_43 : f32 to vector<1x256xf32>
      %57 = arith.addf %55, %56 : vector<1x256xf32>
      %58 = math.rsqrt %57 : vector<1x256xf32>
      %c0_44 = arith.constant 0 : index
      %c0_45 = arith.constant 0 : index
      %59 = vector.load %arg5[%c0_44, %c0_45] : memref<2x256xf32, #tpu.memory_space<vmem>>, vector<1x256xf32>
      tpu.vector_store %arg5[%c0_44, %c0_45], %58 {strides = array<i32>} : memref<2x256xf32, #tpu.memory_space<vmem>>, vector<1x256xf32>,
      %60 = arith.mulf %48, %58 : vector<1x256xf32>
      %c1_46 = arith.constant 1 : index
      %c0_47 = arith.constant 0 : index
      %61 = vector.load %arg5[%c1_46, %c0_47] : memref<2x256xf32, #tpu.memory_space<vmem>>, vector<1x256xf32>
      tpu.vector_store %arg5[%c1_46, %c0_47], %60 {strides = array<i32>} : memref<2x256xf32, #tpu.memory_space<vmem>>, vector<1x256xf32>,
    } else {
    }
    return
  }
  func.func @transform_0(%arg0: i32, %arg1: i32) -> (i32, i32) {
    %c0_i32 = arith.constant 0 : i32
    return %arg1, %arg0 : i32, i32
  }
  func.func @transform_1(%arg0: i32, %arg1: i32) -> (i32, i32) {
    %c0_i32 = arith.constant 0 : i32
    return %arg1, %arg0 : i32, i32
  }
  func.func @transform_2(%arg0: i32, %arg1: i32) -> (i32, i32) {
    %c0_i32 = arith.constant 0 : i32
    %c0_i32_0 = arith.constant 0 : i32
    return %c0_i32, %arg0 : i32, i32
  }
  func.func @transform_3(%arg0: i32, %arg1: i32) -> (i32, i32) {
    %c0_i32 = arith.constant 0 : i32
    %c0_i32_0 = arith.constant 0 : i32
    return %c0_i32, %arg0 : i32, i32
  }
}

</mosaic_0001>

<llo_original>
// kernel: tpu_custom_call.1
$region0: #{tpu_custom_call.1}
  #allocation0 [shape = 'u32[]', space=smem, size = 0x4, offset = 0x4, fixed_abs, tag = 'smem constant byte address 0x4 - core index']
  #allocation1 [shape = 'u32[144,128]{1,0:T(1,128)}', space=vmem, size = 0x12000, scoped, tag = 'internal scratch']
  #allocation2 [shape = 'f32[1,256]{1,0:T(1,128)}', space=vmem, size = 0x400, scoped, tag = 'scratch operand']
  #allocation3 [shape = 'f32[1,256]{1,0:T(1,128)}', space=vmem, size = 0x400, scoped, tag = 'scratch operand']
  #allocation4 [shape = 'f32[1,256]{1,0:T(1,128)}', space=vmem, size = 0x400, scoped, tag = 'scratch operand']
  #allocation5 [shape = 'f32[1,256]{1,0:T(1,128)}', space=vmem, size = 0x400, scoped, tag = 'scratch operand']
  %s0 = inlined_call_operand.hbm [shape: f32[16,256], index: 0, kind: input, shape index: {}]
  %s1 = inlined_call_operand.hbm [shape: f32[16,256], index: 1, kind: input, shape index: {}]
  %s2 = inlined_call_operand.hbm [shape: f32[2,256], index: 2, kind: output, shape index: {0}]
  %s3 = inlined_call_operand.hbm [shape: f32[2,256], index: 3, kind: output, shape index: {1}]
  %4 = xla_tuple %s2, %s3
  %s5 = sld [smem:[#allocation0]]
  $region42: #{tpu_custom_call.1} parent=0
    _
  %s7 = ssub.s32 1, %s5
  %s8 = scalar_select 0, %s7, %s5
  $region1: #{tpu_custom_call.1} parent=0
    #allocation6 [shape = 'u8[16384]{0}', space=vmem, size = 0x4000, scoped, tag = 'input window, operand 0, single buffered']
    #allocation7 [shape = 's32[1]{0}', space=sflag, size = 0x4, scoped, tag = 'scoped memory for tpu_custom_call.1']
    #allocation8 [shape = 's32[1]{0}', space=sflag, size = 0x4, scoped, tag = 'scoped memory for tpu_custom_call.1']
    #allocation9 [shape = 'u8[16384]{0}', space=vmem, size = 0x4000, scoped, tag = 'input window, operand 1, single buffered']
    #allocation10 [shape = 's32[1]{0}', space=sflag, size = 0x4, scoped, tag = 'scoped memory for tpu_custom_call.1']
    #allocation11 [shape = 'u8[2048]{0}', space=vmem, size = 0x800, scoped, tag = 'output window, operand 0, single buffered']
    #allocation12 [shape = 'u8[2048]{0}', space=vmem, size = 0x800, scoped, tag = 'output window, operand 1, single buffered']
    #allocation13 [shape = 's32[1]{0}', space=sflag, size = 0x4, scoped, tag = 'scoped memory for tpu_custom_call.1']
    %9 = vsyncpa [#allocation7], 0
    %10 = vsyncpa [#allocation10], 0
    %11 = vsyncpa [#allocation8], 0
    %12 = vsyncpa [#allocation13], 0
    // Predicated region
    $region2: #{tpu_custom_call.1} parent=1 // pred_check
      _
    $region3: #{tpu_custom_call.1} parent=1 // pred_check_branch
      %14 = sbr.rel (0) target = $region5
    $region4: #{tpu_custom_call.1} parent=1 // pred_region
      %s16 = ssub.s32 512, 512
      %17 = vsyncadd [#allocation7], %s16
      %s18 = sshll.u32 [#allocation6], 4
      %s19 = int_to_ptr.vmem [resolvable:$true] %s18
      %24 = dma.hbm_to_vmem [thread:$0]  %s0, 512, %s19, [#allocation7], 256, 256, 16
    $region5: #{tpu_custom_call.1} parent=1 // pred_fallthru
      _
    // Predicated region
    $region6: #{tpu_custom_call.1} parent=1 // pred_check
      _
    $region7: #{tpu_custom_call.1} parent=1 // pred_check_branch
      %26 = sbr.rel (0) target = $region9
    $region8: #{tpu_custom_call.1} parent=1 // pred_region
      %s28 = ssub.s32 512, 512
      %29 = vsyncadd [#allocation10], %s28
      %s30 = sshll.u32 [#allocation9], 4
      %s31 = int_to_ptr.vmem [resolvable:$true] %s30
      %36 = dma.hbm_to_vmem [thread:$0]  %s1, 512, %s31, [#allocation10], 256, 256, 16
    $region9: #{tpu_custom_call.1} parent=1 // pred_fallthru
      _
    // Predicated region
    $region10: #{tpu_custom_call.1} parent=1 // pred_check
      _
    $region11: #{tpu_custom_call.1} parent=1 // pred_check_branch
      %38 = sbr.rel (0) target = $region13
    $region12: #{tpu_custom_call.1} parent=1 // pred_region
      %39 = dma.done [#allocation7], 512
    $region13: #{tpu_custom_call.1} parent=1 // pred_fallthru
      _
    // Predicated region
    $region14: #{tpu_custom_call.1} parent=1 // pred_check
      _
    $region15: #{tpu_custom_call.1} parent=1 // pred_check_branch
      %41 = sbr.rel (0) target = $region17
    $region16: #{tpu_custom_call.1} parent=1 // pred_region
      %42 = dma.done [#allocation10], 512
    $region17: #{tpu_custom_call.1} parent=1 // pred_fallthru
      _
    %p43 = scmp.eq.s32.totalorder 0, 0
    // Predicated region
    $region18: #{tpu_custom_call.1} parent=1 // pred_check
      %p44 = pneg %p43
    $region19: #{tpu_custom_call.1} parent=1 // pred_check_branch
      %46 = sbr.rel (%p44) target = $region21
    $region20: #{tpu_custom_call.1} parent=1 // pred_region
      %v47 = vlaneseq
      %vm48 = vcmp.ge.s32.totalorder %v47, 0
      %vm49 = vcmp.lt.s32.totalorder %v47, 256
      %vm50 = vmand %vm48, %vm49
      %51 = vst.msk [vmem:[#allocation2] sm:$0x3] %vm50, 0.0
      %52 = vst.msk [vmem:[#allocation3] sm:$0x3] %vm50, 0.0
      %53 = vst.msk [vmem:[#allocation4] sm:$0x3] %vm50, 0.0
      %54 = vst.msk [vmem:[#allocation5] sm:$0x3] %vm50, 0.0
    $region21: #{tpu_custom_call.1} parent=1 // pred_fallthru
      _
    %v55 = vld [vmem:[#allocation6] sm:$0xff]
    %v56 = vld [vmem:[#allocation6 + $0x8] sm:$0xff]
    %v57 = vld [vmem:[#allocation6 + $0x10] sm:$0xff]
    %v58 = vld [vmem:[#allocation6 + $0x18] sm:$0xff]
    %v59 = vld [vmem:[#allocation9] sm:$0xff]
    %v60 = vld [vmem:[#allocation9 + $0x8] sm:$0xff]
    %v61 = vld [vmem:[#allocation9 + $0x10] sm:$0xff]
    %v62 = vld [vmem:[#allocation9 + $0x18] sm:$0xff]
    %v63 = vld [vmem:[#allocation2] sm:$0x3]
    %v64 = vadd.f32 %v55, %v57
    %v65 = vrot.slane %v64, 4
    %v66 = vadd.f32 %v64, %v65
    %v67 = vrot.slane %v66, 2
    %v68 = vadd.f32 %v66, %v67
    %v69 = vrot.slane %v68, 1
    %v70 = vadd.f32 %v68, %v69
    %v71 = vadd.f32 %v56, %v58
    %v72 = vrot.slane %v71, 4
    %v73 = vadd.f32 %v71, %v72
    %v74 = vrot.slane %v73, 2
    %v75 = vadd.f32 %v73, %v74
    %v76 = vrot.slane %v75, 1
    %v77 = vadd.f32 %v75, %v76
    %v80 = vcombine.low %v70, %v77
    %v82 = vunpack.c.l.s4 1966171168
    %v83 = vunpack.c.0.s8 %v82
    %v84 = vlaneseq
    %v85 = vshrl.u32 %v84, 7
    %v86 = vsub.s32 %v83, %v85
    %v87 = vrot.slane %v80, %v86
    %v89 = vunpack.c.l.s4 1966171168
    %v90 = vunpack.c.0.s8 %v89
    %v91 = vlaneseq
    %v92 = vshrl.u32 %v91, 7
    %v93 = vsub.s32 %v90, %v92
    %v94 = vrot.slane %v87, %v93
    %v96 = vadd.f32 %v63, %v94
    %v97 = vlaneseq
    %vm98 = vcmp.ge.s32.totalorder %v97, 0
    %vm99 = vcmp.lt.s32.totalorder %v97, 256
    %vm100 = vmand %vm98, %vm99
    %101 = vst.msk [vmem:[#allocation2] sm:$0x3] %vm100, %v96
    %v102 = vld [vmem:[#allocation3] sm:$0x3]
    %v103 = vmul.f32 %v55, %v55
    %v104 = vmul.f32 %v56, %v56
    %v105 = vmul.f32 %v57, %v57
    %v106 = vmul.f32 %v58, %v58
    %v107 = vadd.f32 %v103, %v105
    %v108 = vrot.slane %v107, 4
    %v109 = vadd.f32 %v107, %v108
    %v110 = vrot.slane %v109, 2
    %v111 = vadd.f32 %v109, %v110
    %v112 = vrot.slane %v111, 1
    %v113 = vadd.f32 %v111, %v112
    %v114 = vadd.f32 %v104, %v106
    %v115 = vrot.slane %v114, 4
    %v116 = vadd.f32 %v114, %v115
    %v117 = vrot.slane %v116, 2
    %v118 = vadd.f32 %v116, %v117
    %v119 = vrot.slane %v118, 1
    %v120 = vadd.f32 %v118, %v119
    %v123 = vcombine.low %v113, %v120
    %v125 = vunpack.c.l.s4 1966171168
    %v126 = vunpack.c.0.s8 %v125
    %v127 = vlaneseq
    %v128 = vshrl.u32 %v127, 7
    %v129 = vsub.s32 %v126, %v128
    %v130 = vrot.slane %v123, %v129
    %v132 = vunpack.c.l.s4 1966171168
    %v133 = vunpack.c.0.s8 %v132
    %v134 = vlaneseq
    %v135 = vshrl.u32 %v134, 7
    %v136 = vsub.s32 %v133, %v135
    %v137 = vrot.slane %v130, %v136
    %v139 = vadd.f32 %v102, %v137
    %140 = vst.msk [vmem:[#allocation3] sm:$0x3] %vm100, %v139
    %v141 = vld [vmem:[#allocation4] sm:$0x3]
    %v142 = vadd.f32 %v59, %v61
    %v143 = vrot.slane %v142, 4
    %v144 = vadd.f32 %v142, %v143
    %v145 = vrot.slane %v144, 2
    %v146 = vadd.f32 %v144, %v145
    %v147 = vrot.slane %v146, 1
    %v148 = vadd.f32 %v146, %v147
    %v149 = vadd.f32 %v60, %v62
    %v150 = vrot.slane %v149, 4
    %v151 = vadd.f32 %v149, %v150
    %v152 = vrot.slane %v151, 2
    %v153 = vadd.f32 %v151, %v152
    %v154 = vrot.slane %v153, 1
    %v155 = vadd.f32 %v153, %v154
    %v158 = vcombine.low %v148, %v155
    %v160 = vunpack.c.l.s4 1966171168
    %v161 = vunpack.c.0.s8 %v160
    %v162 = vlaneseq
    %v163 = vshrl.u32 %v162, 7
    %v164 = vsub.s32 %v161, %v163
    %v165 = vrot.slane %v158, %v164
    %v167 = vunpack.c.l.s4 1966171168
    %v168 = vunpack.c.0.s8 %v167
    %v169 = vlaneseq
    %v170 = vshrl.u32 %v169, 7
    %v171 = vsub.s32 %v168, %v170
    %v172 = vrot.slane %v165, %v171
    %v174 = vadd.f32 %v141, %v172
    %175 = vst.msk [vmem:[#allocation4] sm:$0x3] %vm100, %v174
    %v176 = vld [vmem:[#allocation5] sm:$0x3]
    %v177 = vmul.f32 %v59, %v59
    %v178 = vmul.f32 %v60, %v60
    %v179 = vmul.f32 %v61, %v61
    %v180 = vmul.f32 %v62, %v62
    %v181 = vadd.f32 %v177, %v179
    %v182 = vrot.slane %v181, 4
    %v183 = vadd.f32 %v181, %v182
    %v184 = vrot.slane %v183, 2
    %v185 = vadd.f32 %v183, %v184
    %v186 = vrot.slane %v185, 1
    %v187 = vadd.f32 %v185, %v186
    %v188 = vadd.f32 %v178, %v180
    %v189 = vrot.slane %v188, 4
    %v190 = vadd.f32 %v188, %v189
    %v191 = vrot.slane %v190, 2
    %v192 = vadd.f32 %v190, %v191
    %v193 = vrot.slane %v192, 1
    %v194 = vadd.f32 %v192, %v193
    %v197 = vcombine.low %v187, %v194
    %v199 = vunpack.c.l.s4 1966171168
    %v200 = vunpack.c.0.s8 %v199
    %v201 = vlaneseq
    %v202 = vshrl.u32 %v201, 7
    %v203 = vsub.s32 %v200, %v202
    %v204 = vrot.slane %v197, %v203
    %v206 = vunpack.c.l.s4 1966171168
    %v207 = vunpack.c.0.s8 %v206
    %v208 = vlaneseq
    %v209 = vshrl.u32 %v208, 7
    %v210 = vsub.s32 %v207, %v209
    %v211 = vrot.slane %v204, %v210
    %v213 = vadd.f32 %v176, %v211
    %214 = vst.msk [vmem:[#allocation5] sm:$0x3] %vm100, %v213
    // Predicated region
    $region22: #{tpu_custom_call.1} parent=1 // pred_check
      %p215 = pneg %p43
    $region23: #{tpu_custom_call.1} parent=1 // pred_check_branch
      %217 = sbr.rel (%p215) target = $region25
    $region24: #{tpu_custom_call.1} parent=1 // pred_region
      %v218 = vld [vmem:[#allocation2] sm:$0x3]
      %v219 = vmul.f32 %v218, 0.0625
      %v220 = vld [vmem:[#allocation3] sm:$0x3]
      %v221 = vmul.f32 %v220, 0.0625
      %v222 = vmul.f32 %v219, %v219
      %v223 = vsub.f32 %v221, %v222
      %v224 = vmax.f32 %v223, 0.0
      %v225 = vadd.f32 %v224, 1e-05
      %v226 = vrsqrt.pop %v225
      %227 = vst.msk [vmem:[#allocation11] ss:$2 sm:$0x3] %vm100, %v226
      %v228 = vmul.f32 %v219, %v226
      %s229 = scalar_lea.vmem [#allocation11], 1
      %230 = vst.msk [vmem:[%s229] ss:$2 sm:$0x3] %vm100, %v228
      %v231 = vld [vmem:[#allocation4] sm:$0x3]
      %v232 = vmul.f32 %v231, 0.0625
      %v233 = vld [vmem:[#allocation5] sm:$0x3]
      %v234 = vmul.f32 %v233, 0.0625
      %v235 = vmul.f32 %v232, %v232
      %v236 = vsub.f32 %v234, %v235
      %v237 = vmax.f32 %v236, 0.0
      %v238 = vadd.f32 %v237, 1e-05
      %v239 = vrsqrt.pop %v238
      %240 = vst.msk [vmem:[#allocation12] ss:$2 sm:$0x3] %vm100, %v239
      %v241 = vmul.f32 %v232, %v239
      %s242 = scalar_lea.vmem [#allocation12], 1
      %243 = vst.msk [vmem:[%s242] ss:$2 sm:$0x3] %vm100, %v241
    $region25: #{tpu_custom_call.1} parent=1 // pred_fallthru
      _
    // Predicated region
    $region26: #{tpu_custom_call.1} parent=1 // pred_check
      _
    $region27: #{tpu_custom_call.1} parent=1 // pred_check_branch
      %245 = sbr.rel (0) target = $region29
    $region28: #{tpu_custom_call.1} parent=1 // pred_region
      %s247 = ssub.s32 64, 64
      %248 = vsyncadd [#allocation8], %s247
      %s250 = sshll.u32 [#allocation11], 4
      %s251 = int_to_ptr.vmem [resolvable:$true] %s250
      %253 = dma.vmem_to_hbm [thread:$0]  %s251, 64, %s2, [#allocation8]
    $region29: #{tpu_custom_call.1} parent=1 // pred_fallthru
      _
    // Predicated region
    $region30: #{tpu_custom_call.1} parent=1 // pred_check
      _
    $region31: #{tpu_custom_call.1} parent=1 // pred_check_branch
      %255 = sbr.rel (0) target = $region33
    $region32: #{tpu_custom_call.1} parent=1 // pred_region
      %s257 = ssub.s32 64, 64
      %258 = vsyncadd [#allocation13], %s257
      %s260 = sshll.u32 [#allocation12], 4
      %s261 = int_to_ptr.vmem [resolvable:$true] %s260
      %263 = dma.vmem_to_hbm [thread:$0]  %s261, 64, %s3, [#allocation13]
    $region33: #{tpu_custom_call.1} parent=1 // pred_fallthru
      _
    // Predicated region
    $region34: #{tpu_custom_call.1} parent=1 // pred_check
      _
    $region35: #{tpu_custom_call.1} parent=1 // pred_check_branch
      %265 = sbr.rel (0) target = $region37
    $region36: #{tpu_custom_call.1} parent=1 // pred_region
      %266 = dma.done [#allocation8], 64
    $region37: #{tpu_custom_call.1} parent=1 // pred_fallthru
      _
    // Predicated region
    $region38: #{tpu_custom_call.1} parent=1 // pred_check
      _
    $region39: #{tpu_custom_call.1} parent=1 // pred_check_branch
      %268 = sbr.rel (0) target = $region41
    $region40: #{tpu_custom_call.1} parent=1 // pred_region
      %269 = dma.done [#allocation13], 64
    $region41: #{tpu_custom_call.1} parent=1 // pred_fallthru
      _
    %270 = vsyncpa [#allocation7], 1
    %271 = vsyncpa [#allocation10], 1
    %272 = vsyncpa [#allocation8], 1
    %273 = vsyncpa [#allocation13], 1

</llo_original>
